<compile_context>
chip_gen: v7x
topology: tpu7x:2x2x1
jax: 0.10.0
libtpu: 0.0.40
codegen_flags: <defaults>
</compile_context>

<pallas_src>
import jax
import jax.numpy as jnp
import numpy as np
from jax.experimental import pallas as pl
from jax.experimental.pallas import tpu as pltpu

# ---------------- configuration ----------------
N_ATOMS = 9
EDGE_S_IN, EDGE_V_IN = 16, 4
NODE_S_OUT, NODE_V_OUT = 32, 8
EDGE_S_OUT, EDGE_V_OUT = 32, 8
HIDDEN = max(EDGE_V_IN, EDGE_V_OUT)          # GBP hidden_dim (bottleneck = 1) -> 8
LN_EPS = 1e-5                                # torch.nn.LayerNorm default eps
EPS = 1e-8                                   # safe_norm / clamp eps

DEFAULT_MAX_TILE = 2048                      # rows per block (multiple of 8)
MIN_GRID_STEPS = 8                           # keep >= this many grid steps when possible


def _row_tile(n, max_tile=DEFAULT_MAX_TILE):
    """Row tile: multiple of 8, <= max_tile, and small enough that the grid has
    >= MIN_GRID_STEPS steps when n allows it (megacore sharding + pipeline overlap)."""
    t = -(-n // MIN_GRID_STEPS)              # cdiv(n, MIN_GRID_STEPS)
    t = ((t + 7) // 8) * 8
    t = min(t, max_tile, ((n + 7) // 8) * 8)
    return max(8, t)


def _full_spec(arr):
    """Whole-array block replicated to every grid step (weights / biases)."""
    nd = arr.ndim
    return pl.BlockSpec(arr.shape, lambda i, _nd=nd: (0,) * _nd)


# ---------------- node path kernel ----------------
# atom embedding (one-hot x table on MXU) -> LayerNorm -> GBP((9,0)->(32,8)) scalar_out
def node_kernel(atoms_ref, emb_ref, ln_g_ref, ln_b_ref, w_ref, b_ref, s_out_ref):
    t = atoms_ref.shape[0]
    a = emb_ref.shape[0]
    atoms = atoms_ref[...]                                        # (T, 1) int32
    emb_w = emb_ref[...]
    iota = jax.lax.broadcasted_iota(jnp.int32, (t, a), 1)
    onehot = (iota == atoms).astype(emb_w.dtype)                  # (T, A)
    x = jnp.dot(onehot, emb_w, preferred_element_type=jnp.float32)   # (T, A) f32

    # scalar LayerNorm(A)
    mean = jnp.mean(x, axis=-1, keepdims=True)
    var = jnp.mean((x - mean) ** 2, axis=-1, keepdims=True)
    xn = (x - mean) * jax.lax.rsqrt(var + LN_EPS) * ln_g_ref[...] + ln_b_ref[...]

    # GBP scalar_out (vector_input_dim == 0 -> merged == scalar)
    w = w_ref[...]
    s_out_ref[...] = (jnp.dot(xn.astype(w.dtype), w, preferred_element_type=jnp.float32)
                      + b_ref[...])
    # zero_vector branch of GBP is produced in the wrapper (pure zeros).


# ---------------- edge path kernel ----------------
# LayerNorm (scalar LN + vector RMS over channels) -> GBP((16,4)->(32,8), vector_gate)
# Exactly two MXU matmuls per row block, both block-diagonal fusions.
#
# Layouts (all 2-D, lane-dense):
#   v_ref : (T, 3*Cv)   flattened (E, Cv, 3), lane = c*3 + xyz
#   rhs1  : (2*3*Cv + 2*Cs_in, 3*H + Cv + 2) = (56, 30)
#           rows [v | v*v | s | s*s] -> cols [hidden(xyz-blocked) | per_ch | mean_s | mean_s2]
#   rhs2  : (Cs_in + H + 3*H, Cs_out + 3*Vout + 3*Vout) = (48, 80)
#           rows [sn | hnorm | hidden] -> cols [scalar_out | gate(interleaved) | up(interleaved)]
#   b2    : (1, 80)  = [bs | (bs@wg + bg) interleaved | 0]
#   v_out : (T, 3*Vout)  lane = vo*3 + xyz  -> free reshape to (E, Vout, 3)
def edge_kernel(s_ref, v_ref, ln_g_ref, ln_b_ref, rhs1_ref, rhs2_ref, b2_ref,
                s_out_ref, v_out_ref):
    s = s_ref[...]                                                # (T, 16) f32
    v = v_ref[...]                                                # (T, 12) f32
    rhs1 = rhs1_ref[...]
    rhs2 = rhs2_ref[...]

    # ---- stage-1 fused matmul (vector_down + vector-RMS stats + scalar-LN stats) ----
    lhs1 = jnp.concatenate([v, v * v, s, s * s], axis=-1).astype(rhs1.dtype)   # (T, 56)
    r1 = jnp.dot(lhs1, rhs1, preferred_element_type=jnp.float32)               # (T, 30)

    h3 = 3 * HIDDEN
    hidden = r1[:, :h3]                                           # (T, 24) [hx|hy|hz] (un-normed v)
    per_ch = r1[:, h3:h3 + EDGE_V_IN]                             # (T, 4)  sum_xyz v_c^2
    mean_s = r1[:, h3 + EDGE_V_IN:h3 + EDGE_V_IN + 1]             # (T, 1)
    mean_s2 = r1[:, h3 + EDGE_V_IN + 1:h3 + EDGE_V_IN + 2]        # (T, 1)

    # vector RMS (LayerNorm vector branch); the per-row scale commutes with the row-wise
    # down-projection, so it is applied after the matmul.
    inv_v = jax.lax.rsqrt(
        jnp.mean(jnp.maximum(per_ch, EPS), axis=-1, keepdims=True))
    hidden = hidden * inv_v                                       # (T, 24)

    # scalar LayerNorm from matmul-produced moments
    var_s = jnp.maximum(mean_s2 - mean_s * mean_s, 0.0)
    sn = (s - mean_s) * jax.lax.rsqrt(var_s + LN_EPS) * ln_g_ref[...] + ln_b_ref[...]

    # safe_norm of hidden over xyz
    hx = hidden[:, 0:HIDDEN]
    hy = hidden[:, HIDDEN:2 * HIDDEN]
    hz = hidden[:, 2 * HIDDEN:3 * HIDDEN]
    hnorm = jnp.sqrt(hx * hx + hy * hy + hz * hz) + EPS           # (T, H)

    # ---- stage-2 fused matmul (scalar_out + gate-folded-through-scalar_out + vector_up) ----
    lhs2 = jnp.concatenate([sn, hnorm, hidden], axis=-1).astype(rhs2.dtype)    # (T, 48)
    r2 = (jnp.dot(lhs2, rhs2, preferred_element_type=jnp.float32)
          + b2_ref[...])                                                       # (T, 80)

    scalar_rep = r2[:, :EDGE_S_OUT]                               # (T, 32)
    gate = r2[:, EDGE_S_OUT:EDGE_S_OUT + 3 * EDGE_V_OUT]          # (T, 24), interleaved
    up = r2[:, EDGE_S_OUT + 3 * EDGE_V_OUT:]                      # (T, 24), interleaved

    s_out_ref[...] = scalar_rep
    v_out_ref[...] = up * jax.nn.sigmoid(gate)                    # lane-dense slab


# ---------------- one-time parameter preparation (hoisted out of the per-call jit) ----------------
def prepare_params(params, *, mxu_bf16=True):
    """Build the fused / block-structured weights once. mxu_bf16=True casts MXU operand
    weights to bf16 (f32 accumulation is kept in-kernel); biases / LN params stay f32."""
    mm = jnp.bfloat16 if mxu_bf16 else jnp.float32
    f32 = jnp.float32
    eye3 = jnp.eye(3, dtype=f32)

    # sel[c*3+a, c'] = (c == c')       (per-channel sum of squares)
    sel = jnp.repeat(jnp.eye(EDGE_V_IN, dtype=f32), 3, axis=0)                 # (12, 4)
    # w12[c*3+a, b*H+h] = wd[c, h] * (a == b)   (folds v.transpose(-1,-2) @ wd)
    w12 = jnp.einsum("ch,ab->cabh", params["wd"], eye3).reshape(
        3 * EDGE_V_IN, 3 * HIDDEN)                                             # (12, 24)

    # scalar_out weight (scalar / vector-norm halves), gate folded through scalar_out
    ws_full = jnp.concatenate([params["ws_s"], params["ws_v"]], axis=0)        # (24, 32)
    wg_i = jnp.repeat(ws_full @ params["wg"], 3, axis=1)                       # (24, 24)
    bg_i = jnp.repeat(params["bs"] @ params["wg"] + params["bg"], 3, axis=1)   # (1, 24)
    wsg = jnp.concatenate([ws_full, wg_i], axis=1)                             # (24, 56)
    # wu_i[a*H+h, vo*3+b] = wu[h, vo] * (a == b)   (interleaved (vo, xyz) output)
    wu_i = jnp.einsum("ab,hv->ahvb", eye3, params["wu"]).reshape(
        3 * HIDDEN, EDGE_V_OUT * 3)                                            # (24, 24)

    # ---- stage-1 block-diagonal RHS: [v | v*v | s | s*s] -> [hidden | per_ch | mean_s | mean_s2]
    k1 = 3 * EDGE_V_IN
    rhs1 = jnp.zeros((2 * k1 + 2 * EDGE_S_IN, 3 * HIDDEN + EDGE_V_IN + 2), f32)   # (56, 30)
    rhs1 = rhs1.at[0:k1, 0:3 * HIDDEN].set(w12)
    rhs1 = rhs1.at[k1:2 * k1, 3 * HIDDEN:3 * HIDDEN + EDGE_V_IN].set(sel)
    rhs1 = rhs1.at[2 * k1:2 * k1 + EDGE_S_IN, 3 * HIDDEN + EDGE_V_IN].set(1.0 / EDGE_S_IN)
    rhs1 = rhs1.at[2 * k1 + EDGE_S_IN:, 3 * HIDDEN + EDGE_V_IN + 1].set(1.0 / EDGE_S_IN)

    # ---- stage-2 block-diagonal RHS: [sn | hnorm | hidden] -> [scalar | gate | up]
    rhs2 = jnp.zeros((EDGE_S_IN + HIDDEN + 3 * HIDDEN,
                      EDGE_S_OUT + 3 * EDGE_V_OUT + 3 * EDGE_V_OUT), f32)          # (48, 80)
    rhs2 = rhs2.at[:EDGE_S_IN + HIDDEN, :EDGE_S_OUT + 3 * EDGE_V_OUT].set(wsg)
    rhs2 = rhs2.at[EDGE_S_IN + HIDDEN:, EDGE_S_OUT + 3 * EDGE_V_OUT:].set(wu_i)

    b2 = jnp.concatenate(
        [params["bs"], bg_i, jnp.zeros((1, 3 * EDGE_V_OUT), f32)], axis=1)         # (1, 80)

    return {
        # node path
        "emb_w": params["emb_w"].astype(mm),
        "n_ln_g": params["n_ln_g"].astype(f32),
        "n_ln_b": params["n_ln_b"].astype(f32),
        "n_w": params["n_w"].astype(mm),
        "n_b": params["n_b"].astype(f32),
        # edge path
        "e_ln_g": params["e_ln_g"].astype(f32),
        "e_ln_b": params["e_ln_b"].astype(f32),
        "rhs1": rhs1.astype(mm),
        "rhs2": rhs2.astype(mm),
        "b2": b2,
    }


# ---------------- wrappers ----------------
def node_forward_pallas(atoms, prep, *, max_tile=DEFAULT_MAX_TILE):
    n = atoms.shape[0]
    tile = _row_tile(n, max_tile)
    atoms2d = atoms.reshape(n, 1).astype(jnp.int32)

    s_out = pl.pallas_call(
        node_kernel,
        grid=(pl.cdiv(n, tile),),
        out_shape=jax.ShapeDtypeStruct((n, NODE_S_OUT), jnp.float32),
        in_specs=[
            pl.BlockSpec((tile, 1), lambda i: (i, 0)),
            _full_spec(prep["emb_w"]),
            _full_spec(prep["n_ln_g"]),
            _full_spec(prep["n_ln_b"]),
            _full_spec(prep["n_w"]),
            _full_spec(prep["n_b"]),
        ],
        out_specs=pl.BlockSpec((tile, NODE_S_OUT), lambda i: (i, 0)),
        compiler_params=pltpu.CompilerParams(dimension_semantics=("parallel",)),
    )(atoms2d, prep["emb_w"], prep["n_ln_g"], prep["n_ln_b"],
      prep["n_w"], prep["n_b"])

    node_v = jnp.zeros((n, NODE_V_OUT, 3), jnp.float32)   # GBP zero_vector branch
    return s_out, node_v


def node_forward_xla(atoms, prep):
    # Tiny path (N << E for typical graphs): plain XLA avoids a second pallas_call's
    # fixed launch / pipeline warm-up cost. Same math / dtype behavior as the kernel.
    x = prep["emb_w"].astype(jnp.float32)[atoms]
    mean = jnp.mean(x, -1, keepdims=True)
    var = jnp.mean((x - mean) ** 2, -1, keepdims=True)
    xn = (x - mean) * jax.lax.rsqrt(var + LN_EPS) * prep["n_ln_g"] + prep["n_ln_b"]
    s_out = (jnp.dot(xn.astype(prep["n_w"].dtype), prep["n_w"],
                     preferred_element_type=jnp.float32) + prep["n_b"])
    return s_out, jnp.zeros((atoms.shape[0], NODE_V_OUT, 3), jnp.float32)


def edge_forward(edge_scalar, edge_vector, prep, *, max_tile=DEFAULT_MAX_TILE):
    e = edge_scalar.shape[0]
    tile = _row_tile(e, max_tile)

    # (E, Cv, 3) -> (E, 3*Cv): contiguous reshape (no transpose, no extra HBM pass)
    v_flat = edge_vector.reshape(e, EDGE_V_IN * 3)

    row = lambda c: pl.BlockSpec((tile, c), lambda i: (i, 0))

    s_out, v_out = pl.pallas_call(
        edge_kernel,
        grid=(pl.cdiv(e, tile),),
        out_shape=(jax.ShapeDtypeStruct((e, EDGE_S_OUT), jnp.float32),
                   jax.ShapeDtypeStruct((e, 3 * EDGE_V_OUT), jnp.float32)),
        in_specs=[
            row(EDGE_S_IN),                  # edge scalars
            row(3 * EDGE_V_IN),              # flattened edge vectors
            _full_spec(prep["e_ln_g"]),
            _full_spec(prep["e_ln_b"]),
            _full_spec(prep["rhs1"]),
            _full_spec(prep["rhs2"]),
            _full_spec(prep["b2"]),
        ],
        out_specs=(row(EDGE_S_OUT), row(3 * EDGE_V_OUT)),
        compiler_params=pltpu.CompilerParams(dimension_semantics=("parallel",)),
    )(edge_scalar, v_flat, prep["e_ln_g"], prep["e_ln_b"],
      prep["rhs1"], prep["rhs2"], prep["b2"])

    # (E, 3*Vout) with lane = vo*3 + xyz  ->  (E, Vout, 3): contiguous reshape, free
    return s_out, v_out.reshape(e, EDGE_V_OUT, 3)


def gbp_embedding_forward(atoms, edge_scalar, edge_vector, prep,
                          *, max_tile=DEFAULT_MAX_TILE, node_impl="pallas"):
    if node_impl == "pallas":
        node_rep = node_forward_pallas(atoms, prep, max_tile=max_tile)
    else:
        node_rep = node_forward_xla(atoms, prep)
    edge_rep = edge_forward(edge_scalar, edge_vector, prep, max_tile=max_tile)
    return node_rep, edge_rep


# ---------------- pure-JAX reference (for validation) ----------------
def reference(atoms, edge_scalar, edge_vector, params):
    # node path
    x = params["emb_w"][atoms]
    mean = jnp.mean(x, -1, keepdims=True)
    var = jnp.mean((x - mean) ** 2, -1, keepdims=True)
    xn = (x - mean) / jnp.sqrt(var + LN_EPS) * params["n_ln_g"] + params["n_ln_b"]
    node_s = xn @ params["n_w"] + params["n_b"]
    node_v = jnp.zeros((atoms.shape[0], NODE_V_OUT, 3), jnp.float32)

    # edge LayerNorm
    sq = jnp.maximum(jnp.sum(edge_vector ** 2, -1, keepdims=True), EPS)   # (E, Cv, 1)
    vnorm = jnp.sqrt(jnp.mean(sq, -2, keepdims=True))                     # (E, 1, 1)
    v = edge_vector / vnorm
    s = edge_scalar
    mean = jnp.mean(s, -1, keepdims=True)
    var = jnp.mean((s - mean) ** 2, -1, keepdims=True)
    sn = (s - mean) / jnp.sqrt(var + LN_EPS) * params["e_ln_g"] + params["e_ln_b"]

    # edge GBP
    v_pre = jnp.swapaxes(v, -1, -2)                       # (E, 3, Cv)
    hidden = v_pre @ params["wd"]                         # (E, 3, H)
    hnorm = jnp.sqrt(jnp.sum(hidden ** 2, -2)) + EPS      # (E, H)
    merged = jnp.concatenate([sn, hnorm], -1)
    ws = jnp.concatenate([params["ws_s"], params["ws_v"]], 0)
    scalar_rep = merged @ ws + params["bs"]
    up = jnp.swapaxes(hidden @ params["wu"], -1, -2)      # (E, V_out, 3)
    gate = scalar_rep @ params["wg"] + params["bg"]
    edge_v = up * jax.nn.sigmoid(gate)[..., None]
    return (node_s, node_v), (scalar_rep, edge_v)


# ---------------- parameter init ----------------
def init_params(key):
    ks = jax.random.split(key, 12)
    f = lambda k, shape, s=0.2: (jax.random.normal(k, shape, jnp.float32) * s)
    return {
        # node path
        "emb_w": f(ks[0], (N_ATOMS, N_ATOMS), 1.0),
        "n_ln_g": f(ks[1], (1, N_ATOMS)) + 1.0,
        "n_ln_b": f(ks[2], (1, N_ATOMS)),
        "n_w": f(ks[3], (N_ATOMS, NODE_S_OUT)),
        "n_b": f(ks[4], (1, NODE_S_OUT)),
        # edge path
        "e_ln_g": f(ks[5], (1, EDGE_S_IN)) + 1.0,
        "e_ln_b": f(ks[6], (1, EDGE_S_IN)),
        "wd": f(ks[7], (EDGE_V_IN, HIDDEN)),
        "ws_s": f(ks[8], (EDGE_S_IN, EDGE_S_OUT)),
        "ws_v": f(ks[9], (HIDDEN, EDGE_S_OUT)),
        "bs": f(ks[10], (1, EDGE_S_OUT)),
        "wu": f(ks[11], (HIDDEN, EDGE_V_OUT)),
        "wg": f(jax.random.fold_in(key, 100), (EDGE_S_OUT, EDGE_V_OUT)),
        "bg": f(jax.random.fold_in(key, 101), (1, EDGE_V_OUT)),
    }


def _check(pallas_out, ref_out, rtol, atol):
    (ns, nv), (es, ev) = pallas_out
    (rns, rnv), (res, rev) = ref_out
    np.testing.assert_allclose(np.asarray(ns), np.asarray(rns), rtol=rtol, atol=atol)
    np.testing.assert_allclose(np.asarray(nv), np.asarray(rnv), rtol=rtol, atol=atol)
    np.testing.assert_allclose(np.asarray(es), np.asarray(res), rtol=rtol, atol=atol)
    np.testing.assert_allclose(np.asarray(ev), np.asarray(rev), rtol=rtol, atol=atol)


if __name__ == "__main__":
    key = jax.random.PRNGKey(0)
    k1, k2, k3, kp = jax.random.split(key, 4)
    params = init_params(kp)

    fwd = jax.jit(gbp_embedding_forward, static_argnames=("max_tile", "node_impl"))

    # Small shapes consistent with the module.
    N, E = 8, 16
    atoms = jax.random.randint(k1, (N,), 0, N_ATOMS, dtype=jnp.int32)
    edge_scalar = jax.random.normal(k2, (E, EDGE_S_IN), jnp.float32)
    edge_vector = jax.random.normal(k3, (E, EDGE_V_IN, 3), jnp.float32)

    ref_out = reference(atoms, edge_scalar, edge_vector, params)

    # 1) Exact f32 MXU path: matches the PyTorch module to tight tolerances.
    prep_f32 = prepare_params(params, mxu_bf16=False)
    out = jax.block_until_ready(fwd(atoms, edge_scalar, edge_vector, prep_f32))
    (node_s, node_v), (edge_s, edge_v) = out
    assert node_s.shape == (N, NODE_S_OUT) and node_v.shape == (N, NODE_V_OUT, 3)
    assert edge_s.shape == (E, EDGE_S_OUT) and edge_v.shape == (E, EDGE_V_OUT, 3)
    _check(out, ref_out, rtol=1e-4, atol=1e-5)

    # 2) bf16 MXU operands (default perf config): relaxed tolerances (f32 accumulation).
    prep_bf16 = prepare_params(params, mxu_bf16=True)
    out_bf = jax.block_until_ready(fwd(atoms, edge_scalar, edge_vector, prep_bf16))
    _check(out_bf, ref_out, rtol=5e-2, atol=5e-2)

    # 3) Multi-block grid with a partial trailing block + XLA node path.
    N2, E2 = 24, 44
    atoms2 = jax.random.randint(jax.random.fold_in(key, 1), (N2,), 0, N_ATOMS,
                                dtype=jnp.int32)
    es2 = jax.random.normal(jax.random.fold_in(key, 2), (E2, EDGE_S_IN), jnp.float32)
    ev2 = jax.random.normal(jax.random.fold_in(key, 3), (E2, EDGE_V_IN, 3), jnp.float32)
    out2 = jax.block_until_ready(fwd(atoms2, es2, ev2, prep_f32, node_impl="xla"))
    _check(out2, reference(atoms2, es2, ev2, params), rtol=1e-4, atol=1e-5)

    print("KERNEL_OK")
</pallas_src>

<mosaic_0001>
module attributes {stable_mosaic.version = 11 : i64} {
  func.func @edge_kernel(%arg0: i32, %arg1: memref<8x16xf32, #tpu.memory_space<vmem>>, %arg2: memref<8x12xf32, #tpu.memory_space<vmem>>, %arg3: memref<1x16xf32, #tpu.memory_space<vmem>>, %arg4: memref<1x16xf32, #tpu.memory_space<vmem>>, %arg5: memref<56x30xf32, #tpu.memory_space<vmem>>, %arg6: memref<48x80xf32, #tpu.memory_space<vmem>>, %arg7: memref<1x80xf32, #tpu.memory_space<vmem>>, %arg8: memref<8x32xf32, #tpu.memory_space<vmem>>, %arg9: memref<8x24xf32, #tpu.memory_space<vmem>>) attributes {dimension_semantics = [#tpu.dimension_semantics<parallel>], iteration_bounds = array<i64: 2>, scalar_prefetch = 0 : i64, scratch_operands = 0 : i64, tpu.core_type = #tpu.core_type<tc>, window_params = [{transform_indices = @transform_0, window_bounds = array<i64: 8, 16>}, {transform_indices = @transform_1, window_bounds = array<i64: 8, 12>}, {pipeline_mode = #tpu.pipeline_mode<synchronous>, transform_indices = @transform_2, window_bounds = array<i64: 1, 16>}, {pipeline_mode = #tpu.pipeline_mode<synchronous>, transform_indices = @transform_3, window_bounds = array<i64: 1, 16>}, {pipeline_mode = #tpu.pipeline_mode<synchronous>, transform_indices = @transform_4, window_bounds = array<i64: 56, 30>}, {pipeline_mode = #tpu.pipeline_mode<synchronous>, transform_indices = @transform_5, window_bounds = array<i64: 48, 80>}, {pipeline_mode = #tpu.pipeline_mode<synchronous>, transform_indices = @transform_6, window_bounds = array<i64: 1, 80>}, {transform_indices = @transform_7, window_bounds = array<i64: 8, 32>}, {transform_indices = @transform_8, window_bounds = array<i64: 8, 24>}]} {
    %c0 = arith.constant 0 : index
    %c0_0 = arith.constant 0 : index
    %0 = vector.load %arg1[%c0, %c0_0] : memref<8x16xf32, #tpu.memory_space<vmem>>, vector<8x16xf32>
    %c0_1 = arith.constant 0 : index
    %c0_2 = arith.constant 0 : index
    %1 = vector.load %arg2[%c0_1, %c0_2] : memref<8x12xf32, #tpu.memory_space<vmem>>, vector<8x12xf32>
    %c0_3 = arith.constant 0 : index
    %c0_4 = arith.constant 0 : index
    %2 = vector.load %arg5[%c0_3, %c0_4] : memref<56x30xf32, #tpu.memory_space<vmem>>, vector<56x30xf32>
    %c0_5 = arith.constant 0 : index
    %c0_6 = arith.constant 0 : index
    %3 = vector.load %arg6[%c0_5, %c0_6] : memref<48x80xf32, #tpu.memory_space<vmem>>, vector<48x80xf32>
    %4 = arith.mulf %1, %1 : vector<8x12xf32>
    %5 = arith.mulf %0, %0 : vector<8x16xf32>
    %6 = tpu.concatenate %1, %4, %0, %5 in 1 : vector<8x12xf32>, vector<8x12xf32>, vector<8x16xf32>, vector<8x16xf32> -> vector<8x56xf32>
    %cst = arith.constant dense<0.000000e+00> : vector<8x30xf32>
    %7 = tpu.matmul %6, %2, %cst {dimension_numbers = #tpu.dot_dimension_numbers<[1], [0], [0], [1], [0, 0, 1, 1], [], []>} : vector<8x56xf32>, vector<56x30xf32>, vector<8x30xf32> -> vector<8x30xf32>
    %8 = vector.extract_strided_slice %7 {offsets = [0, 0], sizes = [8, 24], strides = [1, 1]} : vector<8x30xf32> to vector<8x24xf32>
    %9 = vector.extract_strided_slice %7 {offsets = [0, 24], sizes = [8, 4], strides = [1, 1]} : vector<8x30xf32> to vector<8x4xf32>
    %10 = vector.extract_strided_slice %7 {offsets = [0, 28], sizes = [8, 1], strides = [1, 1]} : vector<8x30xf32> to vector<8x1xf32>
    %11 = vector.extract_strided_slice %7 {offsets = [0, 29], sizes = [8, 1], strides = [1, 1]} : vector<8x30xf32> to vector<8x1xf32>
    %cst_7 = arith.constant 9.99999993E-9 : f32
    %12 = vector.broadcast %cst_7 : f32 to vector<8x4xf32>
    %13 = arith.maximumf %9, %12 : vector<8x4xf32>
    %cst_8 = arith.constant dense<0.000000e+00> : vector<8xf32>
    %14 = vector.multi_reduction <add>, %13, %cst_8 [1] : vector<8x4xf32> to vector<8xf32>
    %15 = vector.shape_cast %14 : vector<8xf32> to vector<8x1xf32>
    %cst_9 = arith.constant 4.000000e+00 : f32
    %16 = vector.broadcast %cst_9 : f32 to vector<8x1xf32>
    %17 = arith.divf %15, %16 : vector<8x1xf32>
    %18 = math.rsqrt %17 : vector<8x1xf32>
    %19 = vector.broadcast %18 : vector<8x1xf32> to vector<8x24xf32>
    %20 = arith.mulf %8, %19 : vector<8x24xf32>
    %21 = arith.mulf %10, %10 : vector<8x1xf32>
    %22 = arith.subf %11, %21 : vector<8x1xf32>
    %cst_10 = arith.constant 0.000000e+00 : f32
    %23 = vector.broadcast %cst_10 : f32 to vector<8x1xf32>
    %24 = arith.maximumf %22, %23 : vector<8x1xf32>
    %25 = vector.broadcast %10 : vector<8x1xf32> to vector<8x16xf32>
    %26 = arith.subf %0, %25 : vector<8x16xf32>
    %cst_11 = arith.constant 9.99999974E-6 : f32
    %27 = vector.broadcast %cst_11 : f32 to vector<8x1xf32>
    %28 = arith.addf %24, %27 : vector<8x1xf32>
    %29 = math.rsqrt %28 : vector<8x1xf32>
    %30 = vector.broadcast %29 : vector<8x1xf32> to vector<8x16xf32>
    %31 = arith.mulf %26, %30 : vector<8x16xf32>
    %c0_12 = arith.constant 0 : index
    %c0_13 = arith.constant 0 : index
    %32 = vector.load %arg3[%c0_12, %c0_13] : memref<1x16xf32, #tpu.memory_space<vmem>>, vector<1x16xf32>
    %33 = vector.broadcast %32 : vector<1x16xf32> to vector<8x16xf32>
    %34 = arith.mulf %31, %33 : vector<8x16xf32>
    %c0_14 = arith.constant 0 : index
    %c0_15 = arith.constant 0 : index
    %35 = vector.load %arg4[%c0_14, %c0_15] : memref<1x16xf32, #tpu.memory_space<vmem>>, vector<1x16xf32>
    %36 = vector.broadcast %35 : vector<1x16xf32> to vector<8x16xf32>
    %37 = arith.addf %34, %36 : vector<8x16xf32>
    %38 = vector.extract_strided_slice %20 {offsets = [0, 0], sizes = [8, 8], strides = [1, 1]} : vector<8x24xf32> to vector<8x8xf32>
    %39 = vector.extract_strided_slice %20 {offsets = [0, 8], sizes = [8, 8], strides = [1, 1]} : vector<8x24xf32> to vector<8x8xf32>
    %40 = vector.extract_strided_slice %20 {offsets = [0, 16], sizes = [8, 8], strides = [1, 1]} : vector<8x24xf32> to vector<8x8xf32>
    %41 = arith.mulf %38, %38 : vector<8x8xf32>
    %42 = arith.mulf %39, %39 : vector<8x8xf32>
    %43 = arith.addf %41, %42 : vector<8x8xf32>
    %44 = arith.mulf %40, %40 : vector<8x8xf32>
    %45 = arith.addf %43, %44 : vector<8x8xf32>
    %46 = math.sqrt %45 : vector<8x8xf32>
    %cst_16 = arith.constant 9.99999993E-9 : f32
    %47 = vector.broadcast %cst_16 : f32 to vector<8x8xf32>
    %48 = arith.addf %46, %47 : vector<8x8xf32>
    %49 = tpu.concatenate %37, %48, %20 in 1 : vector<8x16xf32>, vector<8x8xf32>, vector<8x24xf32> -> vector<8x48xf32>
    %cst_17 = arith.constant dense<0.000000e+00> : vector<8x80xf32>
    %50 = tpu.matmul %49, %3, %cst_17 {dimension_numbers = #tpu.dot_dimension_numbers<[1], [0], [0], [1], [0, 0, 1, 1], [], []>} : vector<8x48xf32>, vector<48x80xf32>, vector<8x80xf32> -> vector<8x80xf32>
    %c0_18 = arith.constant 0 : index
    %c0_19 = arith.constant 0 : index
    %51 = vector.load %arg7[%c0_18, %c0_19] : memref<1x80xf32, #tpu.memory_space<vmem>>, vector<1x80xf32>
    %52 = vector.broadcast %51 : vector<1x80xf32> to vector<8x80xf32>
    %53 = arith.addf %50, %52 : vector<8x80xf32>
    %54 = vector.extract_strided_slice %53 {offsets = [0, 0], sizes = [8, 32], strides = [1, 1]} : vector<8x80xf32> to vector<8x32xf32>
    %55 = vector.extract_strided_slice %53 {offsets = [0, 32], sizes = [8, 24], strides = [1, 1]} : vector<8x80xf32> to vector<8x24xf32>
    %56 = vector.extract_strided_slice %53 {offsets = [0, 56], sizes = [8, 24], strides = [1, 1]} : vector<8x80xf32> to vector<8x24xf32>
    %c0_20 = arith.constant 0 : index
    %c0_21 = arith.constant 0 : index
    %57 = vector.load %arg8[%c0_20, %c0_21] : memref<8x32xf32, #tpu.memory_space<vmem>>, vector<8x32xf32>
    tpu.vector_store %arg8[%c0_20, %c0_21], %54 {strides = array<i32>} : memref<8x32xf32, #tpu.memory_space<vmem>>, vector<8x32xf32>,
    %58 = arith.negf %55 : vector<8x24xf32>
    %59 = math.exp %58 : vector<8x24xf32>
    %cst_22 = arith.constant 1.000000e+00 : f32
    %60 = vector.broadcast %cst_22 : f32 to vector<8x24xf32>
    %61 = arith.addf %60, %59 : vector<8x24xf32>
    %62 = arith.divf %60, %61 : vector<8x24xf32>
    %63 = arith.mulf %56, %62 : vector<8x24xf32>
    %c0_23 = arith.constant 0 : index
    %c0_24 = arith.constant 0 : index
    %64 = vector.load %arg9[%c0_23, %c0_24] : memref<8x24xf32, #tpu.memory_space<vmem>>, vector<8x24xf32>
    tpu.vector_store %arg9[%c0_23, %c0_24], %63 {strides = array<i32>} : memref<8x24xf32, #tpu.memory_space<vmem>>, vector<8x24xf32>,
    return
  }
  func.func @transform_0(%arg0: i32) -> (i32, i32) {
    %c0_i32 = arith.constant 0 : i32
    %c0_i32_0 = arith.constant 0 : i32
    return %arg0, %c0_i32 : i32, i32
  }
  func.func @transform_1(%arg0: i32) -> (i32, i32) {
    %c0_i32 = arith.constant 0 : i32
    %c0_i32_0 = arith.constant 0 : i32
    return %arg0, %c0_i32 : i32, i32
  }
  func.func @transform_2(%arg0: i32) -> (i32, i32) {
    %c0_i32 = arith.constant 0 : i32
    %c0_i32_0 = arith.constant 0 : i32
    %c0_i32_1 = arith.constant 0 : i32
    return %c0_i32, %c0_i32_0 : i32, i32
  }
  func.func @transform_3(%arg0: i32) -> (i32, i32) {
    %c0_i32 = arith.constant 0 : i32
    %c0_i32_0 = arith.constant 0 : i32
    %c0_i32_1 = arith.constant 0 : i32
    return %c0_i32, %c0_i32_0 : i32, i32
  }
  func.func @transform_4(%arg0: i32) -> (i32, i32) {
    %c0_i32 = arith.constant 0 : i32
    %c0_i32_0 = arith.constant 0 : i32
    %c0_i32_1 = arith.constant 0 : i32
    return %c0_i32, %c0_i32_0 : i32, i32
  }
  func.func @transform_5(%arg0: i32) -> (i32, i32) {
    %c0_i32 = arith.constant 0 : i32
    %c0_i32_0 = arith.constant 0 : i32
    %c0_i32_1 = arith.constant 0 : i32
    return %c0_i32, %c0_i32_0 : i32, i32
  }
  func.func @transform_6(%arg0: i32) -> (i32, i32) {
    %c0_i32 = arith.constant 0 : i32
    %c0_i32_0 = arith.constant 0 : i32
    %c0_i32_1 = arith.constant 0 : i32
    return %c0_i32, %c0_i32_0 : i32, i32
  }
  func.func @transform_7(%arg0: i32) -> (i32, i32) {
    %c0_i32 = arith.constant 0 : i32
    %c0_i32_0 = arith.constant 0 : i32
    return %arg0, %c0_i32 : i32, i32
  }
  func.func @transform_8(%arg0: i32) -> (i32, i32) {
    %c0_i32 = arith.constant 0 : i32
    %c0_i32_0 = arith.constant 0 : i32
    return %arg0, %c0_i32 : i32, i32
  }
}

module attributes {stable_mosaic.version = 11 : i64} {
  func.func @node_kernel(%arg0: i32, %arg1: memref<8x1xi32, #tpu.memory_space<vmem>>, %arg2: memref<9x9xf32, #tpu.memory_space<vmem>>, %arg3: memref<1x9xf32, #tpu.memory_space<vmem>>, %arg4: memref<1x9xf32, #tpu.memory_space<vmem>>, %arg5: memref<9x32xf32, #tpu.memory_space<vmem>>, %arg6: memref<1x32xf32, #tpu.memory_space<vmem>>, %arg7: memref<8x32xf32, #tpu.memory_space<vmem>>) attributes {dimension_semantics = [#tpu.dimension_semantics<parallel>], iteration_bounds = array<i64: 1>, scalar_prefetch = 0 : i64, scratch_operands = 0 : i64, tpu.core_type = #tpu.core_type<tc>, window_params = [{transform_indices = @transform_0, window_bounds = array<i64: 8, 1>}, {pipeline_mode = #tpu.pipeline_mode<synchronous>, transform_indices = @transform_1, window_bounds = array<i64: 9, 9>}, {pipeline_mode = #tpu.pipeline_mode<synchronous>, transform_indices = @transform_2, window_bounds = array<i64: 1, 9>}, {pipeline_mode = #tpu.pipeline_mode<synchronous>, transform_indices = @transform_3, window_bounds = array<i64: 1, 9>}, {pipeline_mode = #tpu.pipeline_mode<synchronous>, transform_indices = @transform_4, window_bounds = array<i64: 9, 32>}, {pipeline_mode = #tpu.pipeline_mode<synchronous>, transform_indices = @transform_5, window_bounds = array<i64: 1, 32>}, {transform_indices = @transform_6, window_bounds = array<i64: 8, 32>}]} {
    %c0 = arith.constant 0 : index
    %c0_0 = arith.constant 0 : index
    %0 = vector.load %arg1[%c0, %c0_0] : memref<8x1xi32, #tpu.memory_space<vmem>>, vector<8x1xi32>
    %c0_1 = arith.constant 0 : index
    %c0_2 = arith.constant 0 : index
    %1 = vector.load %arg2[%c0_1, %c0_2] : memref<9x9xf32, #tpu.memory_space<vmem>>, vector<9x9xf32>
    %2 = tpu.iota {dimensions = array<i32: 1>} : vector<8x9xi32>
    %3 = vector.broadcast %0 : vector<8x1xi32> to vector<8x9xi32>
    %4 = arith.cmpi eq, %2, %3 : vector<8x9xi32>
    %5 = arith.extui %4 : vector<8x9xi1> to vector<8x9xi32>
    %6 = arith.sitofp %5 : vector<8x9xi32> to vector<8x9xf32>
    %cst = arith.constant dense<0.000000e+00> : vector<8x9xf32>
    %7 = tpu.matmul %6, %1, %cst {dimension_numbers = #tpu.dot_dimension_numbers<[1], [0], [0], [1], [0, 0, 1, 1], [], []>} : vector<8x9xf32>, vector<9x9xf32>, vector<8x9xf32> -> vector<8x9xf32>
    %cst_3 = arith.constant dense<0.000000e+00> : vector<8xf32>
    %8 = vector.multi_reduction <add>, %7, %cst_3 [1] : vector<8x9xf32> to vector<8xf32>
    %9 = vector.shape_cast %8 : vector<8xf32> to vector<8x1xf32>
    %cst_4 = arith.constant 9.000000e+00 : f32
    %10 = vector.broadcast %cst_4 : f32 to vector<8x1xf32>
    %11 = arith.divf %9, %10 : vector<8x1xf32>
    %12 = vector.broadcast %11 : vector<8x1xf32> to vector<8x9xf32>
    %13 = arith.subf %7, %12 : vector<8x9xf32>
    %14 = arith.mulf %13, %13 : vector<8x9xf32>
    %cst_5 = arith.constant dense<0.000000e+00> : vector<8xf32>
    %15 = vector.multi_reduction <add>, %14, %cst_5 [1] : vector<8x9xf32> to vector<8xf32>
    %16 = vector.shape_cast %15 : vector<8xf32> to vector<8x1xf32>
    %cst_6 = arith.constant 9.000000e+00 : f32
    %17 = vector.broadcast %cst_6 : f32 to vector<8x1xf32>
    %18 = arith.divf %16, %17 : vector<8x1xf32>
    %19 = vector.broadcast %11 : vector<8x1xf32> to vector<8x9xf32>
    %20 = arith.subf %7, %19 : vector<8x9xf32>
    %cst_7 = arith.constant 9.99999974E-6 : f32
    %21 = vector.broadcast %cst_7 : f32 to vector<8x1xf32>
    %22 = arith.addf %18, %21 : vector<8x1xf32>
    %23 = math.rsqrt %22 : vector<8x1xf32>
    %24 = vector.broadcast %23 : vector<8x1xf32> to vector<8x9xf32>
    %25 = arith.mulf %20, %24 : vector<8x9xf32>
    %c0_8 = arith.constant 0 : index
    %c0_9 = arith.constant 0 : index
    %26 = vector.load %arg3[%c0_8, %c0_9] : memref<1x9xf32, #tpu.memory_space<vmem>>, vector<1x9xf32>
    %27 = vector.broadcast %26 : vector<1x9xf32> to vector<8x9xf32>
    %28 = arith.mulf %25, %27 : vector<8x9xf32>
    %c0_10 = arith.constant 0 : index
    %c0_11 = arith.constant 0 : index
    %29 = vector.load %arg4[%c0_10, %c0_11] : memref<1x9xf32, #tpu.memory_space<vmem>>, vector<1x9xf32>
    %30 = vector.broadcast %29 : vector<1x9xf32> to vector<8x9xf32>
    %31 = arith.addf %28, %30 : vector<8x9xf32>
    %c0_12 = arith.constant 0 : index
    %c0_13 = arith.constant 0 : index
    %32 = vector.load %arg5[%c0_12, %c0_13] : memref<9x32xf32, #tpu.memory_space<vmem>>, vector<9x32xf32>
    %cst_14 = arith.constant dense<0.000000e+00> : vector<8x32xf32>
    %33 = tpu.matmul %31, %32, %cst_14 {dimension_numbers = #tpu.dot_dimension_numbers<[1], [0], [0], [1], [0, 0, 1, 1], [], []>} : vector<8x9xf32>, vector<9x32xf32>, vector<8x32xf32> -> vector<8x32xf32>
    %c0_15 = arith.constant 0 : index
    %c0_16 = arith.constant 0 : index
    %34 = vector.load %arg6[%c0_15, %c0_16] : memref<1x32xf32, #tpu.memory_space<vmem>>, vector<1x32xf32>
    %35 = vector.broadcast %34 : vector<1x32xf32> to vector<8x32xf32>
    %36 = arith.addf %33, %35 : vector<8x32xf32>
    %c0_17 = arith.constant 0 : index
    %c0_18 = arith.constant 0 : index
    %37 = vector.load %arg7[%c0_17, %c0_18] : memref<8x32xf32, #tpu.memory_space<vmem>>, vector<8x32xf32>
    tpu.vector_store %arg7[%c0_17, %c0_18], %36 {strides = array<i32>} : memref<8x32xf32, #tpu.memory_space<vmem>>, vector<8x32xf32>,
    return
  }
  func.func @transform_0(%arg0: i32) -> (i32, i32) {
    %c0_i32 = arith.constant 0 : i32
    %c0_i32_0 = arith.constant 0 : i32
    return %arg0, %c0_i32 : i32, i32
  }
  func.func @transform_1(%arg0: i32) -> (i32, i32) {
    %c0_i32 = arith.constant 0 : i32
    %c0_i32_0 = arith.constant 0 : i32
    %c0_i32_1 = arith.constant 0 : i32
    return %c0_i32, %c0_i32_0 : i32, i32
  }
  func.func @transform_2(%arg0: i32) -> (i32, i32) {
    %c0_i32 = arith.constant 0 : i32
    %c0_i32_0 = arith.constant 0 : i32
    %c0_i32_1 = arith.constant 0 : i32
    return %c0_i32, %c0_i32_0 : i32, i32
  }
  func.func @transform_3(%arg0: i32) -> (i32, i32) {
    %c0_i32 = arith.constant 0 : i32
    %c0_i32_0 = arith.constant 0 : i32
    %c0_i32_1 = arith.constant 0 : i32
    return %c0_i32, %c0_i32_0 : i32, i32
  }
  func.func @transform_4(%arg0: i32) -> (i32, i32) {
    %c0_i32 = arith.constant 0 : i32
    %c0_i32_0 = arith.constant 0 : i32
    %c0_i32_1 = arith.constant 0 : i32
    return %c0_i32, %c0_i32_0 : i32, i32
  }
  func.func @transform_5(%arg0: i32) -> (i32, i32) {
    %c0_i32 = arith.constant 0 : i32
    %c0_i32_0 = arith.constant 0 : i32
    %c0_i32_1 = arith.constant 0 : i32
    return %c0_i32, %c0_i32_0 : i32, i32
  }
  func.func @transform_6(%arg0: i32) -> (i32, i32) {
    %c0_i32 = arith.constant 0 : i32
    %c0_i32_0 = arith.constant 0 : i32
    return %arg0, %c0_i32 : i32, i32
  }
}

</mosaic_0001>

<llo_original>
// kernel: gbp_embedding_forward.3
$region0: #{gbp_embedding_forward.3}
  #allocation0 [shape = 'u32[]', space=smem, size = 0x4, offset = 0x4, fixed_abs, tag = 'smem constant byte address 0x4 - core index']
  #allocation1 [shape = 'u32[144,128]{1,0:T(1,128)}', space=vmem, size = 0x12000, scoped, tag = 'internal scratch']
  %s0 = inlined_call_operand.vmem [shape: f32[16,16], index: 0, kind: input, shape index: {}]
  %s1 = inlined_call_operand.vmem [shape: f32[16,12], index: 1, kind: input, shape index: {}]
  %s2 = inlined_call_operand.vmem [shape: f32[1,16], index: 2, kind: input, shape index: {}]
  %s3 = inlined_call_operand.vmem [shape: f32[1,16], index: 3, kind: input, shape index: {}]
  %s4 = inlined_call_operand.vmem [shape: f32[56,30], index: 4, kind: input, shape index: {}]
  %s5 = inlined_call_operand.vmem [shape: f32[48,80], index: 5, kind: input, shape index: {}]
  %s6 = inlined_call_operand.vmem [shape: f32[1,80], index: 6, kind: input, shape index: {}]
  %s7 = inlined_call_operand.hbm [shape: f32[16,32], index: 7, kind: output, shape index: {0}]
  %s8 = inlined_call_operand.vmem [shape: f32[16,24], index: 8, kind: output, shape index: {1}]
  %9 = xla_tuple %s7, %s8
  %s10 = sld [smem:[#allocation0]]
  $region69: #{gbp_embedding_forward.3} parent=0
    _
  %s12 = ssub.s32 1, %s10
  %s13 = scalar_select 0, %s12, %s10
  $region1: #{gbp_embedding_forward.3} parent=0
    #allocation2 [shape = 'u8[8192]{0}', space=vmem, size = 0x2000, scoped, tag = 'output window, operand 0']
    #allocation3 [shape = 's32[2]{0}', space=sflag, size = 0x8, scoped, tag = 'scoped memory for gbp_embedding_forward.3']
    %14 = vsyncpa [#allocation3], 0
    %s15 = scalar_lea.sflag [#allocation3], 1
    %16 = vsyncpa %s15, 0
    loop: start=0, step=1, limit=4
    $region2: #{gbp_embedding_forward.3} parent=1 // loop_pre_header
      _
    $region3: #{gbp_embedding_forward.3} parent=1 // loop_header
      %s18 = sphi 0, %s22
      %p19 = scmp.ge.s32.totalorder %s18, 4
      %s28 = sphi 0, %s30
      %s31 = sphi 0, %s28
      %s32 = sphi 0, %s31
      %s48 = sphi 0, %s32
      %s54 = sphi 0, %s56
      %s57 = sphi 0, %s54
      %s58 = sphi 0, %s57
      %s74 = sphi 0, %s58
      %s78 = sphi 0, %s78
      %s80 = sphi 0, %s78
      %s81 = sphi 0, %s80
      %s95 = sphi 0, %s81
      %s99 = sphi 0, %s99
      %s101 = sphi 0, %s99
      %s102 = sphi 0, %s101
      %s116 = sphi 0, %s102
      %s120 = sphi 0, %s120
      %s122 = sphi 0, %s120
      %s123 = sphi 0, %s122
      %s137 = sphi 0, %s123
      %s141 = sphi 0, %s141
      %s143 = sphi 0, %s141
      %s144 = sphi 0, %s143
      %s158 = sphi 0, %s144
      %s162 = sphi 0, %s162
      %s164 = sphi 0, %s162
      %s165 = sphi 0, %s164
      %s179 = sphi 0, %s165
      %s185 = sphi 0, %s187
      %s188 = sphi 0, %s185
      %s189 = sphi 0, %s188
      %s205 = sphi 0, %s189
      %s211 = sphi 0, %s213
      %s214 = sphi 0, %s211
      %s215 = sphi 0, %s214
      %s231 = sphi 0, %s215
    $region4: #{gbp_embedding_forward.3} parent=1 // loop_header_branch
      %21 = sbr.rel (%p19) target = $region8
    $region5: #{gbp_embedding_forward.3} parent=1 // loop_body
      %s23 = ssub.s32 %s18, 1
      %s24 = ssub.s32 %s18, 2
      %s25 = sadd.s32 %s18, 1
      %s26 = ssub.s32 %s18, %s25
      %p27 = scmp.eq.s32.totalorder %s26, 0
      %s29 = sadd.s32 %s28, 1
      %s30 = scalar_select %p27, %s28, %s29
      %p33 = pneg %p27
      %p34 = scmp.eq.s32.totalorder %s18, 1
      %p35 = por %p33, %p34
      %p36 = scmp.ne.s32.totalorder %s28, %s31
      %p37 = scmp.eq.s32.totalorder %s18, 0
      %p38 = por %p36, %p37
      %p39 = scmp.ne.s32.totalorder %s28, %s31
      %p40 = scmp.eq.s32.totalorder %s23, 1
      %p41 = por %p39, %p40
      %p42 = scmp.ne.s32.totalorder %s31, %s32
      %p43 = scmp.eq.s32.totalorder %s23, 0
      %p44 = por %p42, %p43
      %p45 = scmp.ne.s32.totalorder %s31, %s32
      %p46 = scmp.eq.s32.totalorder %s24, 1
      %p47 = por %p45, %p46
      %p49 = scmp.ne.s32.totalorder %s32, %s48
      %p50 = scmp.eq.s32.totalorder %s24, 0
      %p51 = por %p49, %p50
      %s52 = ssub.s32 %s18, %s25
      %p53 = scmp.eq.s32.totalorder %s52, 0
      %s55 = sadd.s32 %s54, 1
      %s56 = scalar_select %p53, %s54, %s55
      %p59 = pneg %p53
      %p60 = scmp.eq.s32.totalorder %s18, 1
      %p61 = por %p59, %p60
      %p62 = scmp.ne.s32.totalorder %s54, %s57
      %p63 = scmp.eq.s32.totalorder %s18, 0
      %p64 = por %p62, %p63
      %p65 = scmp.ne.s32.totalorder %s54, %s57
      %p66 = scmp.eq.s32.totalorder %s23, 1
      %p67 = por %p65, %p66
      %p68 = scmp.ne.s32.totalorder %s57, %s58
      %p69 = scmp.eq.s32.totalorder %s23, 0
      %p70 = por %p68, %p69
      %p71 = scmp.ne.s32.totalorder %s57, %s58
      %p72 = scmp.eq.s32.totalorder %s24, 1
      %p73 = por %p71, %p72
      %p75 = scmp.ne.s32.totalorder %s58, %s74
      %p76 = scmp.eq.s32.totalorder %s24, 0
      %p77 = por %p75, %p76
      %s79 = sadd.s32 %s78, 1
      %p82 = scmp.eq.s32.totalorder %s18, 1
      %p83 = scmp.ne.s32.totalorder %s78, %s80
      %p84 = scmp.eq.s32.totalorder %s18, 0
      %p85 = por %p83, %p84
      %p86 = scmp.ne.s32.totalorder %s78, %s80
      %p87 = scmp.eq.s32.totalorder %s23, 1
      %p88 = por %p86, %p87
      %p89 = scmp.ne.s32.totalorder %s80, %s81
      %p90 = scmp.eq.s32.totalorder %s23, 0
      %p91 = por %p89, %p90
      %p92 = scmp.ne.s32.totalorder %s80, %s81
      %p93 = scmp.eq.s32.totalorder %s24, 1
      %p94 = por %p92, %p93
      %p96 = scmp.ne.s32.totalorder %s81, %s95
      %p97 = scmp.eq.s32.totalorder %s24, 0
      %p98 = por %p96, %p97
      %s100 = sadd.s32 %s99, 1
      %p103 = scmp.eq.s32.totalorder %s18, 1
      %p104 = scmp.ne.s32.totalorder %s99, %s101
      %p105 = scmp.eq.s32.totalorder %s18, 0
      %p106 = por %p104, %p105
      %p107 = scmp.ne.s32.totalorder %s99, %s101
      %p108 = scmp.eq.s32.totalorder %s23, 1
      %p109 = por %p107, %p108
      %p110 = scmp.ne.s32.totalorder %s101, %s102
      %p111 = scmp.eq.s32.totalorder %s23, 0
      %p112 = por %p110, %p111
      %p113 = scmp.ne.s32.totalorder %s101, %s102
      %p114 = scmp.eq.s32.totalorder %s24, 1
      %p115 = por %p113, %p114
      %p117 = scmp.ne.s32.totalorder %s102, %s116
      %p118 = scmp.eq.s32.totalorder %s24, 0
      %p119 = por %p117, %p118
      %s121 = sadd.s32 %s120, 1
      %p124 = scmp.eq.s32.totalorder %s18, 1
      %p125 = scmp.ne.s32.totalorder %s120, %s122
      %p126 = scmp.eq.s32.totalorder %s18, 0
      %p127 = por %p125, %p126
      %p128 = scmp.ne.s32.totalorder %s120, %s122
      %p129 = scmp.eq.s32.totalorder %s23, 1
      %p130 = por %p128, %p129
      %p131 = scmp.ne.s32.totalorder %s122, %s123
      %p132 = scmp.eq.s32.totalorder %s23, 0
      %p133 = por %p131, %p132
      %p134 = scmp.ne.s32.totalorder %s122, %s123
      %p135 = scmp.eq.s32.totalorder %s24, 1
      %p136 = por %p134, %p135
      %p138 = scmp.ne.s32.totalorder %s123, %s137
      %p139 = scmp.eq.s32.totalorder %s24, 0
      %p140 = por %p138, %p139
      %s142 = sadd.s32 %s141, 1
      %p145 = scmp.eq.s32.totalorder %s18, 1
      %p146 = scmp.ne.s32.totalorder %s141, %s143
      %p147 = scmp.eq.s32.totalorder %s18, 0
      %p148 = por %p146, %p147
      %p149 = scmp.ne.s32.totalorder %s141, %s143
      %p150 = scmp.eq.s32.totalorder %s23, 1
      %p151 = por %p149, %p150
      %p152 = scmp.ne.s32.totalorder %s143, %s144
      %p153 = scmp.eq.s32.totalorder %s23, 0
      %p154 = por %p152, %p153
      %p155 = scmp.ne.s32.totalorder %s143, %s144
      %p156 = scmp.eq.s32.totalorder %s24, 1
      %p157 = por %p155, %p156
      %p159 = scmp.ne.s32.totalorder %s144, %s158
      %p160 = scmp.eq.s32.totalorder %s24, 0
      %p161 = por %p159, %p160
      %s163 = sadd.s32 %s162, 1
      %p166 = scmp.eq.s32.totalorder %s18, 1
      %p167 = scmp.ne.s32.totalorder %s162, %s164
      %p168 = scmp.eq.s32.totalorder %s18, 0
      %p169 = por %p167, %p168
      %p170 = scmp.ne.s32.totalorder %s162, %s164
      %p171 = scmp.eq.s32.totalorder %s23, 1
      %p172 = por %p170, %p171
      %p173 = scmp.ne.s32.totalorder %s164, %s165
      %p174 = scmp.eq.s32.totalorder %s23, 0
      %p175 = por %p173, %p174
      %p176 = scmp.ne.s32.totalorder %s164, %s165
      %p177 = scmp.eq.s32.totalorder %s24, 1
      %p178 = por %p176, %p177
      %p180 = scmp.ne.s32.totalorder %s165, %s179
      %p181 = scmp.eq.s32.totalorder %s24, 0
      %p182 = por %p180, %p181
      %s183 = ssub.s32 %s18, %s25
      %p184 = scmp.eq.s32.totalorder %s183, 0
      %s186 = sadd.s32 %s185, 1
      %s187 = scalar_select %p184, %s185, %s186
      %p190 = pneg %p184
      %p191 = scmp.eq.s32.totalorder %s18, 1
      %p192 = por %p190, %p191
      %p193 = scmp.ne.s32.totalorder %s185, %s188
      %p194 = scmp.eq.s32.totalorder %s18, 0
      %p195 = por %p193, %p194
      %p196 = scmp.ne.s32.totalorder %s185, %s188
      %p197 = scmp.eq.s32.totalorder %s23, 1
      %p198 = por %p196, %p197
      %p199 = scmp.ne.s32.totalorder %s188, %s189
      %p200 = scmp.eq.s32.totalorder %s23, 0
      %p201 = por %p199, %p200
      %p202 = scmp.ne.s32.totalorder %s188, %s189
      %p203 = scmp.eq.s32.totalorder %s24, 1
      %p204 = por %p202, %p203
      %p206 = scmp.ne.s32.totalorder %s189, %s205
      %p207 = scmp.eq.s32.totalorder %s24, 0
      %p208 = por %p206, %p207
      %s209 = ssub.s32 %s18, %s25
      %p210 = scmp.eq.s32.totalorder %s209, 0
      %s212 = sadd.s32 %s211, 1
      %s213 = scalar_select %p210, %s211, %s212
      %p216 = pneg %p210
      %p217 = scmp.eq.s32.totalorder %s18, 1
      %p218 = por %p216, %p217
      %p219 = scmp.ne.s32.totalorder %s211, %s214
      %p220 = scmp.eq.s32.totalorder %s18, 0
      %p221 = por %p219, %p220
      %p222 = scmp.ne.s32.totalorder %s211, %s214
      %p223 = scmp.eq.s32.totalorder %s23, 1
      %p224 = por %p222, %p223
      %p225 = scmp.ne.s32.totalorder %s214, %s215
      %p226 = scmp.eq.s32.totalorder %s23, 0
      %p227 = por %p225, %p226
      %p228 = scmp.ne.s32.totalorder %s214, %s215
      %p229 = scmp.eq.s32.totalorder %s24, 1
      %p230 = por %p228, %p229
      %p232 = scmp.ne.s32.totalorder %s215, %s231
      %p233 = scmp.eq.s32.totalorder %s24, 0
      %p234 = por %p232, %p233
      %p235 = scmp.le.s32.totalorder 1, %s18
      %p236 = scmp.lt.s32.totalorder %s18, 3
      %p237 = pnand %p235, %p236
      %p238 = pneg %p237
      // Predicated region
      $region9: #{gbp_embedding_forward.3} parent=5 // pred_check
        _
      $region10: #{gbp_embedding_forward.3} parent=5 // pred_check_branch
        %240 = sbr.rel (%p237) target = $region12
      $region11: #{gbp_embedding_forward.3} parent=5 // pred_region
        %s241 = ssub.s32 %s18, 1
        // Predicated region
        $region13: #{gbp_embedding_forward.3} parent=11 // pred_check
          %p242 = pneg %p91
        $region14: #{gbp_embedding_forward.3} parent=11 // pred_check_branch
          %244 = sbr.rel (%p242) target = $region16
        $region15: #{gbp_embedding_forward.3} parent=11 // pred_region
          _
        $region16: #{gbp_embedding_forward.3} parent=11 // pred_fallthru
          _
        // Predicated region
        $region17: #{gbp_embedding_forward.3} parent=11 // pred_check
          %p245 = pneg %p112
        $region18: #{gbp_embedding_forward.3} parent=11 // pred_check_branch
          %247 = sbr.rel (%p245) target = $region20
        $region19: #{gbp_embedding_forward.3} parent=11 // pred_region
          _
        $region20: #{gbp_embedding_forward.3} parent=11 // pred_fallthru
          _
        // Predicated region
        $region21: #{gbp_embedding_forward.3} parent=11 // pred_check
          %p248 = pneg %p133
        $region22: #{gbp_embedding_forward.3} parent=11 // pred_check_branch
          %250 = sbr.rel (%p248) target = $region24
        $region23: #{gbp_embedding_forward.3} parent=11 // pred_region
          _
        $region24: #{gbp_embedding_forward.3} parent=11 // pred_fallthru
          _
        // Predicated region
        $region25: #{gbp_embedding_forward.3} parent=11 // pred_check
          %p251 = pneg %p154
        $region26: #{gbp_embedding_forward.3} parent=11 // pred_check_branch
          %253 = sbr.rel (%p251) target = $region28
        $region27: #{gbp_embedding_forward.3} parent=11 // pred_region
          _
        $region28: #{gbp_embedding_forward.3} parent=11 // pred_fallthru
          _
        // Predicated region
        $region29: #{gbp_embedding_forward.3} parent=11 // pred_check
          %p254 = pneg %p175
        $region30: #{gbp_embedding_forward.3} parent=11 // pred_check_branch
          %256 = sbr.rel (%p254) target = $region32
        $region31: #{gbp_embedding_forward.3} parent=11 // pred_region
          _
        $region32: #{gbp_embedding_forward.3} parent=11 // pred_fallthru
          _
      $region12: #{gbp_embedding_forward.3} parent=5 // pred_fallthru
        _
      %p257 = scmp.lt.s32.totalorder %s18, 2
      // Predicated region
      $region33: #{gbp_embedding_forward.3} parent=5 // pred_check
        %p258 = pneg %p257
      $region34: #{gbp_embedding_forward.3} parent=5 // pred_check_branch
        %260 = sbr.rel (%p258) target = $region36
      $region35: #{gbp_embedding_forward.3} parent=5 // pred_region
        // Predicated region
        $region37: #{gbp_embedding_forward.3} parent=35 // pred_check
          %p261 = pneg %p38
        $region38: #{gbp_embedding_forward.3} parent=35 // pred_check_branch
          %263 = sbr.rel (%p261) target = $region40
        $region39: #{gbp_embedding_forward.3} parent=35 // pred_region
          %p264 = scmp.lt.s32.totalorder %s18, 1
          %s265 = scalar_select %p264, %s18, 1
          %s266 = smul.addr %s265, 8
          %s267 = scalar_lea.vmem %s0, %s266
        $region40: #{gbp_embedding_forward.3} parent=35 // pred_fallthru
          _
        // Predicated region
        $region41: #{gbp_embedding_forward.3} parent=35 // pred_check
          %p268 = pneg %p64
        $region42: #{gbp_embedding_forward.3} parent=35 // pred_check_branch
          %270 = sbr.rel (%p268) target = $region44
        $region43: #{gbp_embedding_forward.3} parent=35 // pred_region
          %p271 = scmp.lt.s32.totalorder %s18, 1
          %s272 = scalar_select %p271, %s18, 1
          %s273 = smul.addr %s272, 8
          %s274 = scalar_lea.vmem %s1, %s273
        $region44: #{gbp_embedding_forward.3} parent=35 // pred_fallthru
          _
      $region36: #{gbp_embedding_forward.3} parent=5 // pred_fallthru
        _
      %p275 = scmp.le.s32.totalorder 1, %s18
      %p276 = scmp.lt.s32.totalorder %s18, 3
      %p277 = pnand %p275, %p276
      %p278 = pneg %p277
      // Predicated region
      $region45: #{gbp_embedding_forward.3} parent=5 // pred_check
        _
      $region46: #{gbp_embedding_forward.3} parent=5 // pred_check_branch
        %280 = sbr.rel (%p277) target = $region48
      $region47: #{gbp_embedding_forward.3} parent=5 // pred_region
        %s281 = ssub.s32 %s18, 1
        %p282 = scmp.lt.s32.totalorder %s23, 1
        %s283 = scalar_select %p282, %s23, 1
        %s284 = smul.addr %s283, 8
        %s285 = scalar_lea.vmem %s0, %s284
        %p286 = pneg %p44
        %p287 = pneg %p41
        %p288 = scmp.lt.s32.totalorder %s23, 1
        %s289 = scalar_select %p288, %s23, 1
        %s290 = smul.addr %s289, 8
        %s291 = scalar_lea.vmem %s1, %s290
        %p292 = pneg %p70
        %p293 = pneg %p67
        %p294 = pneg %p91
        %p295 = pneg %p88
        %p296 = pneg %p112
        %p297 = pneg %p109
        %p298 = pneg %p133
        %p299 = pneg %p130
        %p300 = pneg %p154
        %p301 = pneg %p151
        %p302 = pneg %p175
        %p303 = pneg %p172
        %p304 = pneg %p201
        %p305 = pneg %p198
        %s306 = sand.u32 %s188, 1
        %s307 = scalar_lea.sflag [#allocation3], %s306
        %s308 = sand.u32 %s188, 1
        %s309 = smul.addr %s308, 8
        %s310 = scalar_lea.vmem [#allocation2], %s309
        %p311 = pneg %p227
        %p312 = pneg %p224
        %p313 = scmp.lt.s32.totalorder %s23, 1
        %s314 = scalar_select %p313, %s23, 1
        %s315 = smul.addr %s314, 8
        %s316 = scalar_lea.vmem %s8, %s315
        %p317 = scmp.lt.s32.totalorder %s23, 1
        %s318 = scalar_select %p317, %s23, 1
        %s319 = smul.addr %s318, 8
        %s320 = scalar_lea.vmem %s0, %s319
        %p321 = scmp.lt.s32.totalorder %s23, 1
        %s322 = scalar_select %p321, %s23, 1
        %s323 = smul.addr %s322, 8
        %s324 = scalar_lea.vmem %s1, %s323
        %p325 = scmp.lt.s32.totalorder %s23, 1
        %s326 = scalar_select %p325, %s23, 1
        %s327 = smul.addr %s326, 8
        %s328 = scalar_lea.vmem %s8, %s327
        %v329 = vld [vmem:[%s320] sm:$0xff]
        %v330 = vld [vmem:[%s324] sm:$0xff]
        %v331 = vld [vmem:[%s4] sm:$0xff]
        %v332 = vld [vmem:[%s4 + $0x8] sm:$0xff]
        %v333 = vld [vmem:[%s4 + $0x10] sm:$0xff]
        %v334 = vld [vmem:[%s4 + $0x18] sm:$0xff]
        %v335 = vld [vmem:[%s4 + $0x20] sm:$0xff]
        %v336 = vld [vmem:[%s4 + $0x28] sm:$0xff]
        %v337 = vld [vmem:[%s4 + $0x30] sm:$0xff]
        %v338 = vld [vmem:[%s5] sm:$0xff]
        %v339 = vld [vmem:[%s5 + $0x8] sm:$0xff]
        %v340 = vld [vmem:[%s5 + $0x10] sm:$0xff]
        %v341 = vld [vmem:[%s5 + $0x18] sm:$0xff]
        %v342 = vld [vmem:[%s5 + $0x20] sm:$0xff]
        %v343 = vld [vmem:[%s5 + $0x28] sm:$0xff]
        %v344 = vmul.f32 %v330, %v330
        %v345 = vmul.f32 %v329, %v329
        %347 = vrot.lane.b32.xlu0 %v344, 12
        %v348 = vpop.permute.xlu0 %347
        %351 = vrot.lane.b32.xlu0 %v329, 24
        %v352 = vpop.permute.xlu0 %351
        %355 = vrot.lane.b32.xlu0 %v345, 40
        %v356 = vpop.permute.xlu0 %355
        %vm358 = vcmask 97280
        %v359 = vsel %vm358, %v330, %v348
        %vm360 = vcmask 195584
        %v361 = vsel %vm360, %v359, %v352
        %vm362 = vcmask 326656
        %v363 = vsel %vm362, %v361, %v356
        %vm364 = vcmask 457728
        %v366 = vsel %vm364, %v363, 0
        %368 = vmatprep.subr.mxu0 0.0
        %369 = vmatpush1.msra.mxu0 %v331
        %370 = vmatprep.subr.mxu0 0.0
        %371 = vmatpush1.msra.mxu0 %v332
        %372 = vmatprep.subr.mxu0 0.0
        %373 = vmatpush1.msra.mxu0 %v333
        %374 = vmatprep.subr.mxu0 0.0
        %375 = vmatpush1.msra.mxu0 %v334
        %376 = vmatprep.subr.mxu0 0.0
        %377 = vmatpush1.msra.mxu0 %v335
        %378 = vmatprep.subr.mxu0 0.0
        %379 = vmatpush1.msra.mxu0 %v336
        %380 = vmatprep.subr.mxu0 0.0
        %381 = vmatpush1.msra.mxu0 %v337
        %382 = vmatprep.subr.mxu0 0.0
        %383 = vmatpush1.msra.mxu0 0.0
        %384 = vmatprep.subr.mxu0 0.0
        %385 = vmatpush1.msra.mxu0 0.0
        %386 = vmatprep.subr.mxu0 0.0
        %387 = vmatpush1.msra.mxu0 0.0
        %388 = vmatprep.subr.mxu0 0.0
        %389 = vmatpush1.msra.mxu0 0.0
        %390 = vmatprep.subr.mxu0 0.0
        %391 = vmatpush1.msra.mxu0 0.0
        %392 = vmatprep.subr.mxu0 0.0
        %393 = vmatpush1.msra.mxu0 0.0
        %394 = vmatprep.subr.mxu0 0.0
        %395 = vmatpush1.msra.mxu0 0.0
        %396 = vmatprep.subr.mxu0 0.0
        %397 = vmatpush1.msra.mxu0 0.0
        %398 = vmatprep.subr.mxu0 0.0
        %399 = vmatpush1.msra.mxu0 0.0
        %400 = vmatprep.subr.mxu0 0.0
        %401 = vmatpush1.msra.mxu0 0.0
        %402 = vmatprep.subr.mxu0 0.0
        %403 = vmatpush1.msra.mxu0 0.0
        %404 = vmatprep.subr.mxu0 0.0
        %405 = vmatpush1.msra.mxu0 0.0
        %406 = vmatprep.subr.mxu0 0.0
        %407 = vmatpush1.msra.mxu0 0.0
        %408 = vmatprep.subr.mxu0 0.0
        %409 = vmatpush1.msra.mxu0 0.0
        %410 = vmatprep.subr.mxu0 0.0
        %411 = vmatpush1.msra.mxu0 0.0
        %412 = vmatprep.subr.mxu0 0.0
        %413 = vmatpush1.msra.mxu0 0.0
        %414 = vmatprep.subr.mxu0 0.0
        %415 = vmatpush1.msra.mxu0 0.0
        %416 = vmatprep.subr.mxu0 0.0
        %417 = vmatpush1.msra.mxu0 0.0
        %418 = vmatprep.subr.mxu0 0.0
        %419 = vmatpush1.msra.mxu0 0.0
        %420 = vmatprep.subr.mxu0 0.0
        %421 = vmatpush1.msra.mxu0 0.0
        %422 = vmatprep.subr.mxu0 0.0
        %423 = vmatpush1.msra.mxu0 0.0
        %424 = vmatprep.subr.mxu0 0.0
        %425 = vmatpush1.msra.mxu0 0.0
        %426 = vmatprep.subr.mxu0 0.0
        %427 = vmatpush1.msra.mxu0 0.0
        %428 = vmatprep.subr.mxu0 0.0
        %429 = vmatpush1.msra.mxu0 0.0
        %430 = vmatprep.subr.mxu0 0.0
        %431 = vmatpush1.msra.mxu0 0.0
        %432 = vmatprep.mubr.f32.mxu0 0.0
        %433 = vmatmul.mubr.f32.gmra.mrb[0].mxu0 %v366
        %v434 = vpop.f32.mrb[0].mxu0
        %v435 = vadd.f32 0.0, %v434
        %v436 = vpop.f32.mrb[0].mxu0
        %437 = vdwg.mxu0
        %v438 = vmax.f32 %v435, 1e-08
        %440 = vrot.lane.b32.xlu0 %v438, 104
        %v441 = vpop.permute.xlu0 %440
        %vm443 = vcmask 31744
        %v444 = vsel %vm443, %v441, 0.0
        %445 = vadd.xlane.f32.xlu0 %v444
        %v446 = vpop.xlane.xlu0 %445
        %v447 = vrcp.pop 4.0
        %v448 = vmul.f32 %v446, %v447
        %v449 = vrsqrt.pop %v448
        %v450 = vmul.f32 %v435, %v449
        %v451 = vmul.f32 %v435, %v435
        %453 = vrot.lane.b32.xlu0 %v451, 1
        %v454 = vpop.permute.xlu0 %453
        %v456 = vsub.f32 %v435, %v454
        %v457 = vmax.f32 %v456, 0.0
        %459 = vset.pattern.permute.xlu0 28
        %460 = vperm.xlu0 %459, %v435
        %v461 = vpop.permute.xlu0 %460
        %v463 = vsub.f32 %v329, %v461
        %v464 = vadd.f32 %v457, 1e-05
        %v465 = vrsqrt.pop %v464
        %467 = vset.pattern.permute.xlu0 29
        %468 = vperm.xlu0 %467, %v465
        %v469 = vpop.permute.xlu0 %468
        %v471 = vmul.f32 %v463, %v469
        %v472 = vld [vmem:[%s2] sm:$0x1]
        %v474 = vlaneseq
        %v475 = vshrl.u32 %v474, 7
        %v476 = vsub.s32 0, %v475
        %v477 = vrot.slane %v472, %v476
        %v479 = vmul.f32 %v471, %v477
        %v480 = vld [vmem:[%s3] sm:$0x1]
        %v482 = vlaneseq
        %v483 = vshrl.u32 %v482, 7
        %v484 = vsub.s32 0, %v483
        %v485 = vrot.slane %v480, %v484
        %v487 = vadd.f32 %v479, %v485
        %v488 = vmul.f32 %v450, %v450
        %490 = vrot.lane.b32.xlu0 %v488, 120
        %v491 = vpop.permute.xlu0 %490
        %v493 = vadd.f32 %v488, %v491
        %494 = vrot.lane.b32.xlu0 %v488, 112
        %v495 = vpop.permute.xlu0 %494
        %v497 = vadd.f32 %v493, %v495
        %v498 = vrsqrt.pop %v497
        %v499 = vmul.f32 %v497, %v498
        %vm500 = vcmp.eq.f32.partialorder %v497, inf
        %v501 = vsel %vm500, %v497, %v499
        %vm502 = vcmp.eq.f32.partialorder %v497, 0.0
        %v503 = vand.u32 %v497, 2147483648
        %v504 = vsel %vm502, %v503, %v501
        %v505 = vadd.f32 %v504, 1e-08
        %507 = vrot.lane.b32.xlu0 %v505, 16
        %v508 = vpop.permute.xlu0 %507
        %511 = vrot.lane.b32.xlu0 %v450, 24
        %v512 = vpop.permute.xlu0 %511
        %vm514 = vcmask 130048
        %v515 = vsel %vm514, %v487, %v508
        %v516 = vsel %vm360, %v515, %v512
        %v517 = vld [vmem:[%s6] sm:$0x1]
        %v519 = vlaneseq
        %v520 = vshrl.u32 %v519, 7
        %v521 = vsub.s32 0, %v520
        %v522 = vrot.slane %v517, %v521
        %vm524 = vcmask 392192
        %v526 = vsel %vm524, %v516, 0
        %528 = vmatprep.subr.mxu0 0.0
        %529 = vmatpush1.msra.mxu0 %v338
        %530 = vmatprep.subr.mxu0 0.0
        %531 = vmatpush1.msra.mxu0 %v339
        %532 = vmatprep.subr.mxu0 0.0
        %533 = vmatpush1.msra.mxu0 %v340
        %534 = vmatprep.subr.mxu0 0.0
        %535 = vmatpush1.msra.mxu0 %v341
        %536 = vmatprep.subr.mxu0 0.0
        %537 = vmatpush1.msra.mxu0 %v342
        %538 = vmatprep.subr.mxu0 0.0
        %539 = vmatpush1.msra.mxu0 %v343
        %540 = vmatprep.subr.mxu0 0.0
        %541 = vmatpush1.msra.mxu0 0.0
        %542 = vmatprep.subr.mxu0 0.0
        %543 = vmatpush1.msra.mxu0 0.0
        %544 = vmatprep.subr.mxu0 0.0
        %545 = vmatpush1.msra.mxu0 0.0
        %546 = vmatprep.subr.mxu0 0.0
        %547 = vmatpush1.msra.mxu0 0.0
        %548 = vmatprep.subr.mxu0 0.0
        %549 = vmatpush1.msra.mxu0 0.0
        %550 = vmatprep.subr.mxu0 0.0
        %551 = vmatpush1.msra.mxu0 0.0
        %552 = vmatprep.subr.mxu0 0.0
        %553 = vmatpush1.msra.mxu0 0.0
        %554 = vmatprep.subr.mxu0 0.0
        %555 = vmatpush1.msra.mxu0 0.0
        %556 = vmatprep.subr.mxu0 0.0
        %557 = vmatpush1.msra.mxu0 0.0
        %558 = vmatprep.subr.mxu0 0.0
        %559 = vmatpush1.msra.mxu0 0.0
        %560 = vmatprep.subr.mxu0 0.0
        %561 = vmatpush1.msra.mxu0 0.0
        %562 = vmatprep.subr.mxu0 0.0
        %563 = vmatpush1.msra.mxu0 0.0
        %564 = vmatprep.subr.mxu0 0.0
        %565 = vmatpush1.msra.mxu0 0.0
        %566 = vmatprep.subr.mxu0 0.0
        %567 = vmatpush1.msra.mxu0 0.0
        %568 = vmatprep.subr.mxu0 0.0
        %569 = vmatpush1.msra.mxu0 0.0
        %570 = vmatprep.subr.mxu0 0.0
        %571 = vmatpush1.msra.mxu0 0.0
        %572 = vmatprep.subr.mxu0 0.0
        %573 = vmatpush1.msra.mxu0 0.0
        %574 = vmatprep.subr.mxu0 0.0
        %575 = vmatpush1.msra.mxu0 0.0
        %576 = vmatprep.subr.mxu0 0.0
        %577 = vmatpush1.msra.mxu0 0.0
        %578 = vmatprep.subr.mxu0 0.0
        %579 = vmatpush1.msra.mxu0 0.0
        %580 = vmatprep.subr.mxu0 0.0
        %581 = vmatpush1.msra.mxu0 0.0
        %582 = vmatprep.subr.mxu0 0.0
        %583 = vmatpush1.msra.mxu0 0.0
        %584 = vmatprep.subr.mxu0 0.0
        %585 = vmatpush1.msra.mxu0 0.0
        %586 = vmatprep.subr.mxu0 0.0
        %587 = vmatpush1.msra.mxu0 0.0
        %588 = vmatprep.subr.mxu0 0.0
        %589 = vmatpush1.msra.mxu0 0.0
        %590 = vmatprep.subr.mxu0 0.0
        %591 = vmatpush1.msra.mxu0 0.0
        %592 = vmatprep.mubr.f32.mxu0 0.0
        %593 = vmatmul.mubr.f32.gmra.mrb[0].mxu0 %v526
        %v594 = vpop.f32.mrb[0].mxu0
        %v595 = vadd.f32 %v522, %v594
        %v596 = vpop.f32.mrb[0].mxu0
        %597 = vdwg.mxu0
        %vm598 = vcmask 261120
        %599 = vst.msk [vmem:[%s310] sm:$0xff] %vm598, %v595
        %v600 = vxor.u32 %v595, 2147483648
        %v601 = vmul.f32 %v600, 1.442695
        %v602 = vpow.pop %v601
        %v603 = vadd.f32 %v602, 1.0
        %v604 = vrcp.pop %v603
        %v605 = vmul.f32 1.0, %v604
        %607 = vrot.lane.b32.xlu0 %v605, 24
        %v608 = vpop.permute.xlu0 %607
        %v610 = vmul.f32 %v595, %v608
        %612 = vrot.lane.b32.xlu0 %v610, 72
        %v613 = vpop.permute.xlu0 %612
        %615 = vst.msk [vmem:[%s328] sm:$0xff] %vm360, %v613
        %s616 = sand.u32 %s188, 1
        %s617 = scalar_lea.sflag [#allocation3], %s616
        %s618 = sand.u32 %s188, 1
        %s619 = smul.addr %s618, 8
        %s620 = scalar_lea.vmem [#allocation2], %s619
        %p621 = scmp.lt.s32.totalorder %s23, 1
        %s622 = scalar_select %p621, %s23, 1
        %s623 = smul.addr %s622, 8
        %s624 = scalar_lea.vmem %s8, %s623
        // Predicated region
        $region49: #{gbp_embedding_forward.3} parent=47 // pred_check
          %p625 = pneg %p198
        $region50: #{gbp_embedding_forward.3} parent=47 // pred_check_branch
          %627 = sbr.rel (%p625) target = $region52
        $region51: #{gbp_embedding_forward.3} parent=47 // pred_region
          %s629 = ssub.s32 128, 128
          %630 = vsyncadd %s617, %s629
          %s631 = smul.addr %s23, 128
          %s632 = scalar_lea.hbm %s7, %s631
          %s634 = sshll.u32 %s620, 4
          %s635 = int_to_ptr.vmem [resolvable:$true] %s634
          %637 = dma.vmem_to_hbm [thread:$0]  %s635, 128, %s632, %s617
        $region52: #{gbp_embedding_forward.3} parent=47 // pred_fallthru
          _
        // Predicated region
        $region53: #{gbp_embedding_forward.3} parent=47 // pred_check
          %p638 = pneg %p224
        $region54: #{gbp_embedding_forward.3} parent=47 // pred_check_branch
          %640 = sbr.rel (%p638) target = $region56
        $region55: #{gbp_embedding_forward.3} parent=47 // pred_region
          _
        $region56: #{gbp_embedding_forward.3} parent=47 // pred_fallthru
          _
      $region48: #{gbp_embedding_forward.3} parent=5 // pred_fallthru
        _
      %p641 = scmp.le.s32.totalorder 2, %s18
      // Predicated region
      $region57: #{gbp_embedding_forward.3} parent=5 // pred_check
        %p642 = pneg %p641
      $region58: #{gbp_embedding_forward.3} parent=5 // pred_check_branch
        %644 = sbr.rel (%p642) target = $region60
      $region59: #{gbp_embedding_forward.3} parent=5 // pred_region
        %s645 = ssub.s32 %s18, 2
        // Predicated region
        $region61: #{gbp_embedding_forward.3} parent=59 // pred_check
          %p646 = pneg %p204
        $region62: #{gbp_embedding_forward.3} parent=59 // pred_check_branch
          %648 = sbr.rel (%p646) target = $region64
        $region63: #{gbp_embedding_forward.3} parent=59 // pred_region
          %s649 = sand.u32 %s189, 1
          %s650 = scalar_lea.sflag [#allocation3], %s649
          %s651 = sand.u32 %s189, 1
          %s652 = smul.addr %s651, 8
          %s653 = scalar_lea.vmem [#allocation2], %s652
          %654 = dma.done %s650, 128
        $region64: #{gbp_embedding_forward.3} parent=59 // pred_fallthru
          _
        // Predicated region
        $region65: #{gbp_embedding_forward.3} parent=59 // pred_check
          %p655 = pneg %p230
        $region66: #{gbp_embedding_forward.3} parent=59 // pred_check_branch
          %657 = sbr.rel (%p655) target = $region68
        $region67: #{gbp_embedding_forward.3} parent=59 // pred_region
          %p658 = scmp.lt.s32.totalorder %s24, 1
          %s659 = scalar_select %p658, %s24, 1
          %s660 = smul.addr %s659, 8
          %s661 = scalar_lea.vmem %s8, %s660
        $region68: #{gbp_embedding_forward.3} parent=59 // pred_fallthru
          _
      $region60: #{gbp_embedding_forward.3} parent=5 // pred_fallthru
        _
    $region6: #{gbp_embedding_forward.3} parent=1 // loop_footer
      %s22 = sadd.s32 1, %s18
    $region7: #{gbp_embedding_forward.3} parent=1 // loop_footer_branch
      %17 = sbr.rel target = $region3
    $region8: #{gbp_embedding_forward.3} parent=1 // loop_exit
      _
    %662 = vsyncpa [#allocation3], 1
    %s663 = scalar_lea.sflag [#allocation3], 1
    %664 = vsyncpa %s663, 1

// kernel: gbp_embedding_forward.2
$region0: #{gbp_embedding_forward.2}
  #allocation0 [shape = 'u32[]', space=smem, size = 0x4, offset = 0x4, fixed_abs, tag = 'smem constant byte address 0x4 - core index']
  #allocation1 [shape = 'u32[144,128]{1,0:T(1,128)}', space=vmem, size = 0x12000, scoped, tag = 'internal scratch']
  %s0 = inlined_call_operand.vmem [shape: s32[8,1], index: 0, kind: input, shape index: {}]
  %s1 = inlined_call_operand.vmem [shape: f32[9,9], index: 1, kind: input, shape index: {}]
  %s2 = inlined_call_operand.vmem [shape: f32[1,9], index: 2, kind: input, shape index: {}]
  %s3 = inlined_call_operand.vmem [shape: f32[1,9], index: 3, kind: input, shape index: {}]
  %s4 = inlined_call_operand.vmem [shape: f32[9,32], index: 4, kind: input, shape index: {}]
  %s5 = inlined_call_operand.vmem [shape: f32[1,32], index: 5, kind: input, shape index: {}]
  %s6 = inlined_call_operand.hbm [shape: f32[8,32], index: 6, kind: output, shape index: {}]
  %s7 = sld [smem:[#allocation0]]
  $region34: #{gbp_embedding_forward.2} parent=0
    _
  %s9 = ssub.s32 1, %s7
  %s10 = scalar_select 0, %s9, %s7
  $region1: #{gbp_embedding_forward.2} parent=0
    #allocation2 [shape = 'u8[4096]{0}', space=vmem, size = 0x1000, scoped, tag = 'output window, operand 0, single buffered']
    #allocation3 [shape = 's32[1]{0}', space=sflag, size = 0x4, scoped, tag = 'scoped memory for gbp_embedding_forward.2']
    %11 = vsyncpa [#allocation3], 0
    // Predicated region
    $region2: #{gbp_embedding_forward.2} parent=1 // pred_check
      _
    $region3: #{gbp_embedding_forward.2} parent=1 // pred_check_branch
      %13 = sbr.rel (0) target = $region5
    $region4: #{gbp_embedding_forward.2} parent=1 // pred_region
      _
    $region5: #{gbp_embedding_forward.2} parent=1 // pred_fallthru
      _
    // Predicated region
    $region6: #{gbp_embedding_forward.2} parent=1 // pred_check
      _
    $region7: #{gbp_embedding_forward.2} parent=1 // pred_check_branch
      %15 = sbr.rel (0) target = $region9
    $region8: #{gbp_embedding_forward.2} parent=1 // pred_region
      _
    $region9: #{gbp_embedding_forward.2} parent=1 // pred_fallthru
      _
    // Predicated region
    $region10: #{gbp_embedding_forward.2} parent=1 // pred_check
      _
    $region11: #{gbp_embedding_forward.2} parent=1 // pred_check_branch
      %17 = sbr.rel (0) target = $region13
    $region12: #{gbp_embedding_forward.2} parent=1 // pred_region
      _
    $region13: #{gbp_embedding_forward.2} parent=1 // pred_fallthru
      _
    // Predicated region
    $region14: #{gbp_embedding_forward.2} parent=1 // pred_check
      _
    $region15: #{gbp_embedding_forward.2} parent=1 // pred_check_branch
      %19 = sbr.rel (0) target = $region17
    $region16: #{gbp_embedding_forward.2} parent=1 // pred_region
      _
    $region17: #{gbp_embedding_forward.2} parent=1 // pred_fallthru
      _
    // Predicated region
    $region18: #{gbp_embedding_forward.2} parent=1 // pred_check
      _
    $region19: #{gbp_embedding_forward.2} parent=1 // pred_check_branch
      %21 = sbr.rel (0) target = $region21
    $region20: #{gbp_embedding_forward.2} parent=1 // pred_region
      _
    $region21: #{gbp_embedding_forward.2} parent=1 // pred_fallthru
      _
    // Predicated region
    $region22: #{gbp_embedding_forward.2} parent=1 // pred_check
      _
    $region23: #{gbp_embedding_forward.2} parent=1 // pred_check_branch
      %23 = sbr.rel (0) target = $region25
    $region24: #{gbp_embedding_forward.2} parent=1 // pred_region
      _
    $region25: #{gbp_embedding_forward.2} parent=1 // pred_fallthru
      _
    %v24 = vld [vmem:[%s0] sm:$0xff]
    %v25 = vld [vmem:[%s1] sm:$0xff]
    %v26 = vld [vmem:[%s1 + $0x8] sm:$0x1]
    %v27 = vlaneseq
    %v28 = vand.u32 %v27, 127
    %29 = vset.pattern.permute.xlu0 0
    %30 = vperm.xlu0 %29, %v24
    %v31 = vpop.permute.xlu0 %30
    %vm32 = vcmp.eq.s32.totalorder %v28, %v31
    %v33 = vsel %vm32, 1, 0
    %v34 = vcvt.s32.f32 %v33
    %vm35 = vcmask 72704
    %v37 = vsel %vm35, %v34, 0
    %vm39 = vcmask 1040384
    %v41 = vsel %vm39, %v26, 0
    %43 = vmatprep.subr.mxu0 0.0
    %44 = vmatpush1.msra.mxu0 %v25
    %45 = vmatprep.subr.mxu0 0.0
    %46 = vmatpush1.msra.mxu0 %v41
    %47 = vmatprep.subr.mxu0 0.0
    %48 = vmatpush1.msra.mxu0 0.0
    %49 = vmatprep.subr.mxu0 0.0
    %50 = vmatpush1.msra.mxu0 0.0
    %51 = vmatprep.subr.mxu0 0.0
    %52 = vmatpush1.msra.mxu0 0.0
    %53 = vmatprep.subr.mxu0 0.0
    %54 = vmatpush1.msra.mxu0 0.0
    %55 = vmatprep.subr.mxu0 0.0
    %56 = vmatpush1.msra.mxu0 0.0
    %57 = vmatprep.subr.mxu0 0.0
    %58 = vmatpush1.msra.mxu0 0.0
    %59 = vmatprep.subr.mxu0 0.0
    %60 = vmatpush1.msra.mxu0 0.0
    %61 = vmatprep.subr.mxu0 0.0
    %62 = vmatpush1.msra.mxu0 0.0
    %63 = vmatprep.subr.mxu0 0.0
    %64 = vmatpush1.msra.mxu0 0.0
    %65 = vmatprep.subr.mxu0 0.0
    %66 = vmatpush1.msra.mxu0 0.0
    %67 = vmatprep.subr.mxu0 0.0
    %68 = vmatpush1.msra.mxu0 0.0
    %69 = vmatprep.subr.mxu0 0.0
    %70 = vmatpush1.msra.mxu0 0.0
    %71 = vmatprep.subr.mxu0 0.0
    %72 = vmatpush1.msra.mxu0 0.0
    %73 = vmatprep.subr.mxu0 0.0
    %74 = vmatpush1.msra.mxu0 0.0
    %75 = vmatprep.subr.mxu0 0.0
    %76 = vmatpush1.msra.mxu0 0.0
    %77 = vmatprep.subr.mxu0 0.0
    %78 = vmatpush1.msra.mxu0 0.0
    %79 = vmatprep.subr.mxu0 0.0
    %80 = vmatpush1.msra.mxu0 0.0
    %81 = vmatprep.subr.mxu0 0.0
    %82 = vmatpush1.msra.mxu0 0.0
    %83 = vmatprep.subr.mxu0 0.0
    %84 = vmatpush1.msra.mxu0 0.0
    %85 = vmatprep.subr.mxu0 0.0
    %86 = vmatpush1.msra.mxu0 0.0
    %87 = vmatprep.subr.mxu0 0.0
    %88 = vmatpush1.msra.mxu0 0.0
    %89 = vmatprep.subr.mxu0 0.0
    %90 = vmatpush1.msra.mxu0 0.0
    %91 = vmatprep.subr.mxu0 0.0
    %92 = vmatpush1.msra.mxu0 0.0
    %93 = vmatprep.subr.mxu0 0.0
    %94 = vmatpush1.msra.mxu0 0.0
    %95 = vmatprep.subr.mxu0 0.0
    %96 = vmatpush1.msra.mxu0 0.0
    %97 = vmatprep.subr.mxu0 0.0
    %98 = vmatpush1.msra.mxu0 0.0
    %99 = vmatprep.subr.mxu0 0.0
    %100 = vmatpush1.msra.mxu0 0.0
    %101 = vmatprep.subr.mxu0 0.0
    %102 = vmatpush1.msra.mxu0 0.0
    %103 = vmatprep.subr.mxu0 0.0
    %104 = vmatpush1.msra.mxu0 0.0
    %105 = vmatprep.subr.mxu0 0.0
    %106 = vmatpush1.msra.mxu0 0.0
    %107 = vmatprep.mubr.f32.mxu0 0.0
    %108 = vmatmul.mubr.f32.gmra.mrb[0].mxu0 %v37
    %v109 = vpop.f32.mrb[0].mxu0
    %v110 = vadd.f32 0.0, %v109
    %v111 = vpop.f32.mrb[0].mxu0
    %112 = vdwg.mxu0
    %v113 = vsel %vm35, %v110, 0.0
    %114 = vadd.xlane.f32.xlu0 %v113
    %v115 = vpop.xlane.xlu0 %114
    %v116 = vrcp.pop 9.0
    %v117 = vmul.f32 %v115, %v116
    %v118 = vsub.f32 %v110, %v117
    %v119 = vmul.f32 %v118, %v118
    %v120 = vsel %vm35, %v119, 0.0
    %121 = vadd.xlane.f32.xlu0 %v120
    %v122 = vpop.xlane.xlu0 %121
    %v123 = vmul.f32 %v122, %v116
    %v124 = vadd.f32 %v123, 1e-05
    %v125 = vrsqrt.pop %v124
    %v126 = vmul.f32 %v118, %v125
    %v127 = vld [vmem:[%s2] sm:$0x1]
    %v129 = vlaneseq
    %v130 = vshrl.u32 %v129, 7
    %v131 = vsub.s32 0, %v130
    %v132 = vrot.slane %v127, %v131
    %v134 = vmul.f32 %v126, %v132
    %v135 = vld [vmem:[%s3] sm:$0x1]
    %v137 = vlaneseq
    %v138 = vshrl.u32 %v137, 7
    %v139 = vsub.s32 0, %v138
    %v140 = vrot.slane %v135, %v139
    %v142 = vadd.f32 %v134, %v140
    %v143 = vld [vmem:[%s4] sm:$0xff]
    %v144 = vld [vmem:[%s4 + $0x8] sm:$0x1]
    %v145 = vld [vmem:[%s5] sm:$0x1]
    %v147 = vlaneseq
    %v148 = vshrl.u32 %v147, 7
    %v149 = vsub.s32 0, %v148
    %v150 = vrot.slane %v145, %v149
    %v153 = vsel %vm35, %v142, 0
    %v156 = vsel %vm39, %v144, 0
    %158 = vmatprep.subr.mxu0 0.0
    %159 = vmatpush1.msra.mxu0 %v143
    %160 = vmatprep.subr.mxu0 0.0
    %161 = vmatpush1.msra.mxu0 %v156
    %162 = vmatprep.subr.mxu0 0.0
    %163 = vmatpush1.msra.mxu0 0.0
    %164 = vmatprep.subr.mxu0 0.0
    %165 = vmatpush1.msra.mxu0 0.0
    %166 = vmatprep.subr.mxu0 0.0
    %167 = vmatpush1.msra.mxu0 0.0
    %168 = vmatprep.subr.mxu0 0.0
    %169 = vmatpush1.msra.mxu0 0.0
    %170 = vmatprep.subr.mxu0 0.0
    %171 = vmatpush1.msra.mxu0 0.0
    %172 = vmatprep.subr.mxu0 0.0
    %173 = vmatpush1.msra.mxu0 0.0
    %174 = vmatprep.subr.mxu0 0.0
    %175 = vmatpush1.msra.mxu0 0.0
    %176 = vmatprep.subr.mxu0 0.0
    %177 = vmatpush1.msra.mxu0 0.0
    %178 = vmatprep.subr.mxu0 0.0
    %179 = vmatpush1.msra.mxu0 0.0
    %180 = vmatprep.subr.mxu0 0.0
    %181 = vmatpush1.msra.mxu0 0.0
    %182 = vmatprep.subr.mxu0 0.0
    %183 = vmatpush1.msra.mxu0 0.0
    %184 = vmatprep.subr.mxu0 0.0
    %185 = vmatpush1.msra.mxu0 0.0
    %186 = vmatprep.subr.mxu0 0.0
    %187 = vmatpush1.msra.mxu0 0.0
    %188 = vmatprep.subr.mxu0 0.0
    %189 = vmatpush1.msra.mxu0 0.0
    %190 = vmatprep.subr.mxu0 0.0
    %191 = vmatpush1.msra.mxu0 0.0
    %192 = vmatprep.subr.mxu0 0.0
    %193 = vmatpush1.msra.mxu0 0.0
    %194 = vmatprep.subr.mxu0 0.0
    %195 = vmatpush1.msra.mxu0 0.0
    %196 = vmatprep.subr.mxu0 0.0
    %197 = vmatpush1.msra.mxu0 0.0
    %198 = vmatprep.subr.mxu0 0.0
    %199 = vmatpush1.msra.mxu0 0.0
    %200 = vmatprep.subr.mxu0 0.0
    %201 = vmatpush1.msra.mxu0 0.0
    %202 = vmatprep.subr.mxu0 0.0
    %203 = vmatpush1.msra.mxu0 0.0
    %204 = vmatprep.subr.mxu0 0.0
    %205 = vmatpush1.msra.mxu0 0.0
    %206 = vmatprep.subr.mxu0 0.0
    %207 = vmatpush1.msra.mxu0 0.0
    %208 = vmatprep.subr.mxu0 0.0
    %209 = vmatpush1.msra.mxu0 0.0
    %210 = vmatprep.subr.mxu0 0.0
    %211 = vmatpush1.msra.mxu0 0.0
    %212 = vmatprep.subr.mxu0 0.0
    %213 = vmatpush1.msra.mxu0 0.0
    %214 = vmatprep.subr.mxu0 0.0
    %215 = vmatpush1.msra.mxu0 0.0
    %216 = vmatprep.subr.mxu0 0.0
    %217 = vmatpush1.msra.mxu0 0.0
    %218 = vmatprep.subr.mxu0 0.0
    %219 = vmatpush1.msra.mxu0 0.0
    %220 = vmatprep.subr.mxu0 0.0
    %221 = vmatpush1.msra.mxu0 0.0
    %222 = vmatprep.mubr.f32.mxu0 0.0
    %223 = vmatmul.mubr.f32.gmra.mrb[0].mxu0 %v153
    %v224 = vpop.f32.mrb[0].mxu0
    %v225 = vadd.f32 %v150, %v224
    %v226 = vpop.f32.mrb[0].mxu0
    %227 = vdwg.mxu0
    %vm228 = vcmask 261120
    %229 = vst.msk [vmem:[#allocation2] sm:$0xff] %vm228, %v225
    // Predicated region
    $region26: #{gbp_embedding_forward.2} parent=1 // pred_check
      _
    $region27: #{gbp_embedding_forward.2} parent=1 // pred_check_branch
      %231 = sbr.rel (0) target = $region29
    $region28: #{gbp_embedding_forward.2} parent=1 // pred_region
      %s233 = ssub.s32 128, 128
      %234 = vsyncadd [#allocation3], %s233
      %s236 = sshll.u32 [#allocation2], 4
      %s237 = int_to_ptr.vmem [resolvable:$true] %s236
      %239 = dma.vmem_to_hbm [thread:$0]  %s237, 128, %s6, [#allocation3]
    $region29: #{gbp_embedding_forward.2} parent=1 // pred_fallthru
      _
    // Predicated region
    $region30: #{gbp_embedding_forward.2} parent=1 // pred_check
      _
    $region31: #{gbp_embedding_forward.2} parent=1 // pred_check_branch
      %241 = sbr.rel (0) target = $region33
    $region32: #{gbp_embedding_forward.2} parent=1 // pred_region
      %242 = dma.done [#allocation3], 128
    $region33: #{gbp_embedding_forward.2} parent=1 // pred_fallthru
      _
    %243 = vsyncpa [#allocation3], 1

</llo_original>
